<compile_context>
chip_gen: v6e
topology: v6e:2x2x1
jax: 0.10.0
libtpu: 0.0.40
codegen_flags: <defaults>
</compile_context>

<pallas_src>
import functools

import jax
import jax.numpy as jnp
from jax.experimental import pallas as pl
from jax.experimental.pallas import tpu as pltpu

# ----------------------------- constants (stand-ins for src.vars) -------------
TAG_SET = {"B": 0, "M": 1, "E": 2, "S": 3, "pad": 4}   # n_tags = 5, pad = 4
N_DSETS = 4                                            # len(criterion_encode)
LANE = 128                                             # lane-dense head width
_NEG = -1e30


# ----------------------------- chip-adaptive VMEM cap --------------------------
def _default_vmem_cap():
    """min(physical VMEM / 2, 64 MiB): 64 MiB on v5e/v6e (128 MiB phys),
    32 MiB on v7x (64 MiB phys). Falls back to the proven-safe 32 MiB."""
    try:
        phys = int(pltpu.get_tpu_info().vmem_capacity_bytes)
        return min(phys // 2, 64 * 1024 * 1024)
    except Exception:
        return 32 * 1024 * 1024


_VMEM_CAP = _default_vmem_cap()
_FFN_ROWS = 1024 if _VMEM_CAP >= 64 * 1024 * 1024 else 512


# ----------------------------- Buffered(1) feature probe -----------------------
def _probe_buffered():
    """Single-buffered weight BlockSpecs save VMEM but pipeline_mode is a newer
    API — probe once so the script degrades gracefully on older jax."""
    try:
        def _copy(x_ref, o_ref):
            o_ref[...] = x_ref[...]
        spec = pl.BlockSpec((8, 128), lambda i: (0, 0),
                            pipeline_mode=pl.Buffered(1))
        fn = pl.pallas_call(
            _copy,
            out_shape=jax.ShapeDtypeStruct((8, 128), jnp.float32),
            grid=(1,),
            in_specs=[spec],
            out_specs=pl.BlockSpec((8, 128), lambda i: (0, 0)))
        jax.block_until_ready(fn(jnp.zeros((8, 128), jnp.float32)))
        return True
    except Exception:
        return False


_HAS_BUFFERED = _probe_buffered()


def _wspec(shape, index_map):
    """BlockSpec for a grid-invariant operand (weights / biases / LN params).
    The block is identical every grid step, so the default double buffer is
    pure VMEM waste (matters most under v7x's 64 MiB VMEM)."""
    if _HAS_BUFFERED:
        return pl.BlockSpec(shape, index_map, pipeline_mode=pl.Buffered(1))
    return pl.BlockSpec(shape, index_map)


def _pick_block_rows(m, target):
    """Largest row tile <= target that exactly divides m and is a multiple of 8
    (Mosaic sublane constraint); fall back to the full row count."""
    if m <= target:
        return m
    best = m
    for bm in range(8, target + 1, 8):
        if m % bm == 0:
            best = bm
    return best


# ----------------------------- embedding LayerNorm -----------------------------
def _layernorm_kernel(x_ref, g_ref, b_ref, o_ref):
    x = x_ref[...]
    mu = jnp.mean(x, axis=-1, keepdims=True)
    var = jnp.mean(jnp.square(x - mu), axis=-1, keepdims=True)
    o_ref[...] = (x - mu) * jax.lax.rsqrt(var + 1e-12) * g_ref[...] + b_ref[...]


def layer_norm(x, g, b):
    """x: (M, H) f32 — row-tiled grid (pipelined, megacore-splittable)."""
    M, H = x.shape
    tm = _pick_block_rows(M, 512)
    return pl.pallas_call(
        _layernorm_kernel,
        out_shape=jax.ShapeDtypeStruct((M, H), jnp.float32),
        grid=(M // tm,),
        in_specs=[
            pl.BlockSpec((tm, H), lambda i: (i, 0)),
            _wspec((1, H), lambda i: (0, 0)),
            _wspec((1, H), lambda i: (0, 0)),
        ],
        out_specs=pl.BlockSpec((tm, H), lambda i: (i, 0)),
        compiler_params=pltpu.CompilerParams(
            dimension_semantics=("parallel",),
            vmem_limit_bytes=_VMEM_CAP),
    )(x, g.reshape(1, H), b.reshape(1, H))


# ----------------------------- fused attention block ---------------------------
def _attn_block_kernel(x_ref, m_ref, wqkv_ref, bqkv_ref, wo_ref, bo_ref,
                       g_ref, b_ref, o_ref, ctx_ref, *, num_heads):
    x = x_ref[0]                       # (S, H) f32
    S, H = x.shape
    dh = H // num_heads

    # fused QKV projection (bf16 MXU matmul, f32 accumulate).
    # NOTE: the 1/sqrt(dh) attention scale is pre-baked into the Q columns of
    # wqkv/bqkv by init_params, so no (S,S) score scaling is needed below.
    qkv = jnp.dot(x.astype(jnp.bfloat16), wqkv_ref[...],
                  preferred_element_type=jnp.float32) + bqkv_ref[...]   # (S, 3H)

    # additive key mask, broadcast ONCE (JAX does not CSE broadcast_in_dim).
    mask_b = jnp.broadcast_to(m_ref[0], (S, S))                          # (S, S)

    for h in range(num_heads):                     # static unroll over heads
        q_h = qkv[:, h * dh:(h + 1) * dh]
        k_h = qkv[:, H + h * dh:H + (h + 1) * dh]
        v_h = qkv[:, 2 * H + h * dh:2 * H + (h + 1) * dh]
        s = jax.lax.dot_general(q_h.astype(jnp.bfloat16),
                                k_h.astype(jnp.bfloat16),
                                (((1,), (1,)), ((), ())),
                                preferred_element_type=jnp.float32)      # (S, S)
        s = s + mask_b
        e = jnp.exp(s - jnp.max(s, axis=-1, keepdims=True))
        # deferred softmax normalization: matmul first, then scale the (S, dh)
        # context rows instead of the (S, S) probability matrix.
        ctx_h = jnp.dot(e.astype(jnp.bfloat16), v_h.astype(jnp.bfloat16),
                        preferred_element_type=jnp.float32)              # (S, dh)
        inv = pl.reciprocal(jnp.sum(e, axis=-1, keepdims=True), approx=True)
        ctx_ref[:, h * dh:(h + 1) * dh] = ctx_h * inv    # lane-offset scratch write

    attn_out = jnp.dot(ctx_ref[...].astype(jnp.bfloat16), wo_ref[...],
                       preferred_element_type=jnp.float32) + bo_ref[...]
    y = attn_out + x
    mu = jnp.mean(y, axis=-1, keepdims=True)
    var = jnp.mean(jnp.square(y - mu), axis=-1, keepdims=True)
    o_ref[0] = (y - mu) * jax.lax.rsqrt(var + 1e-12) * g_ref[...] + b_ref[...]


def attention_block(x, mask_add, wqkv, bqkv, wo, bo, g, b, num_heads):
    """x: (B, S, H) f32, mask_add: (B, 1, S) f32 -> (B, S, H) f32.
    wqkv/bqkv must have the 1/sqrt(dh) scale baked into the Q columns."""
    B, S, H = x.shape
    kern = functools.partial(_attn_block_kernel, num_heads=num_heads)
    return pl.pallas_call(
        kern,
        out_shape=jax.ShapeDtypeStruct((B, S, H), jnp.float32),
        grid=(B,),
        in_specs=[
            pl.BlockSpec((1, S, H), lambda i: (i, 0, 0)),
            pl.BlockSpec((1, 1, S), lambda i: (i, 0, 0)),
            _wspec((H, 3 * H), lambda i: (0, 0)),
            _wspec((1, 3 * H), lambda i: (0, 0)),
            _wspec((H, H), lambda i: (0, 0)),
            _wspec((1, H), lambda i: (0, 0)),
            _wspec((1, H), lambda i: (0, 0)),
            _wspec((1, H), lambda i: (0, 0)),
        ],
        out_specs=pl.BlockSpec((1, S, H), lambda i: (i, 0, 0)),
        scratch_shapes=[pltpu.VMEM((S, H), jnp.float32)],   # per-batch ctx buffer
        compiler_params=pltpu.CompilerParams(
            dimension_semantics=("parallel",),
            vmem_limit_bytes=_VMEM_CAP),
    )(x, mask_add, wqkv, bqkv.reshape(1, 3 * H), wo, bo.reshape(1, H),
      g.reshape(1, H), b.reshape(1, H))


# ----------------------------- fused FFN block ----------------------------------
def _ffn_block_kernel(x_ref, w1_ref, b1_ref, w2_ref, b2_ref, g_ref, b_ref, o_ref):
    x = x_ref[...]                                                       # (tm, H)
    h = jnp.dot(x.astype(jnp.bfloat16), w1_ref[...],
                preferred_element_type=jnp.float32) + b1_ref[...]
    h = jax.nn.gelu(h, approximate=True)
    h = jnp.dot(h.astype(jnp.bfloat16), w2_ref[...],
                preferred_element_type=jnp.float32) + b2_ref[...]
    y = h + x
    mu = jnp.mean(y, axis=-1, keepdims=True)
    var = jnp.mean(jnp.square(y - mu), axis=-1, keepdims=True)
    o_ref[...] = (y - mu) * jax.lax.rsqrt(var + 1e-12) * g_ref[...] + b_ref[...]


def ffn_block(x, w1, b1, w2, b2, g, b):
    """x: (M, H) f32 -> (M, H) f32. Row-tiled grid with divisor-based tile pick."""
    M, H = x.shape
    Iw = w1.shape[1]
    tm = _pick_block_rows(M, _FFN_ROWS)
    return pl.pallas_call(
        _ffn_block_kernel,
        out_shape=jax.ShapeDtypeStruct((M, H), jnp.float32),
        grid=(M // tm,),
        in_specs=[
            pl.BlockSpec((tm, H), lambda i: (i, 0)),
            _wspec((H, Iw), lambda i: (0, 0)),
            _wspec((1, Iw), lambda i: (0, 0)),
            _wspec((Iw, H), lambda i: (0, 0)),
            _wspec((1, H), lambda i: (0, 0)),
            _wspec((1, H), lambda i: (0, 0)),
            _wspec((1, H), lambda i: (0, 0)),
        ],
        out_specs=pl.BlockSpec((tm, H), lambda i: (i, 0)),
        compiler_params=pltpu.CompilerParams(
            dimension_semantics=("parallel",),
            vmem_limit_bytes=_VMEM_CAP),
    )(x, w1, b1.reshape(1, Iw), w2, b2.reshape(1, H),
      g.reshape(1, H), b.reshape(1, H))


# ----------------------------- heads + softmax + CE epilogue --------------------
def _criterion_head_kernel(hc_ref, w_ref, b_ref, lab_ref, pred_ref, loss_ref,
                           *, n_dsets):
    logits = jnp.dot(hc_ref[...].astype(jnp.bfloat16), w_ref[...],
                     preferred_element_type=jnp.float32) + b_ref[...]
    col = jax.lax.broadcasted_iota(jnp.int32, logits.shape, 1)
    logits = jnp.where(col < n_dsets, logits, _NEG)     # mask lane padding
    mx = jnp.max(logits, axis=-1, keepdims=True)
    e = jnp.exp(logits - mx)
    denom = jnp.sum(e, axis=-1, keepdims=True)
    pred_ref[...] = e / denom                           # exact softmax for output
    lse = mx + jnp.log(denom)
    lab = lab_ref[...]                                  # (B, 1) int32
    tgt = jnp.sum(jnp.where(col == lab, logits, 0.0), axis=-1, keepdims=True)
    # nn.CrossEntropyLoss default: mean over all rows
    loss_ref[...] = jnp.sum(lse - tgt, keepdims=True) / float(logits.shape[0])


def _bmes_head_kernel(hb_ref, w_ref, b_ref, lab_ref, pred_ref, loss_ref,
                      sum_ref, cnt_ref, *, n_tags, ignore_index):
    i = pl.program_id(0)

    @pl.when(i == 0)
    def _():
        sum_ref[...] = jnp.zeros_like(sum_ref)
        cnt_ref[...] = jnp.zeros_like(cnt_ref)

    logits = jnp.dot(hb_ref[...].astype(jnp.bfloat16), w_ref[...],
                     preferred_element_type=jnp.float32) + b_ref[...]
    col = jax.lax.broadcasted_iota(jnp.int32, logits.shape, 1)
    logits = jnp.where(col < n_tags, logits, _NEG)      # mask lane padding
    mx = jnp.max(logits, axis=-1, keepdims=True)
    e = jnp.exp(logits - mx)
    denom = jnp.sum(e, axis=-1, keepdims=True)
    pred_ref[...] = e / denom                           # exact softmax for output
    lse = mx + jnp.log(denom)

    lab = lab_ref[...]                                  # (tm, 1) int32
    tgt = jnp.sum(jnp.where(col == lab, logits, 0.0), axis=-1, keepdims=True)
    valid = (lab != ignore_index).astype(jnp.float32)
    sum_ref[...] += jnp.sum((lse - tgt) * valid, keepdims=True)
    cnt_ref[...] += jnp.sum(valid, keepdims=True)

    # running masked mean; final grid step leaves the complete value.
    # guard cnt==0 (fully padded batch) -> loss 0 instead of NaN.
    loss_ref[...] = sum_ref[...] / jnp.maximum(cnt_ref[...], 1.0)


def heads_and_losses(hidden, crit_w, crit_b, bmes_w, bmes_b, answer,
                     n_dsets, n_tags, ignore_index):
    B, S, H = hidden.shape
    M = B * (S - 2)
    hc = hidden[:, 1, :]                              # (B, H)   criterion token
    hb = hidden[:, 2:, :].reshape(M, H)               # (M, H)   BMES tokens
    lab_c = answer[:, 0].reshape(B, 1).astype(jnp.int32)
    lab_b = answer[:, 1:].reshape(M, 1).astype(jnp.int32)

    # --- criterion head: tiny (B rows), single un-gridded call -------------
    cpred, closs = pl.pallas_call(
        functools.partial(_criterion_head_kernel, n_dsets=n_dsets),
        out_shape=(jax.ShapeDtypeStruct((B, LANE), jnp.float32),
                   jax.ShapeDtypeStruct((1, 1), jnp.float32)),
        compiler_params=pltpu.CompilerParams(vmem_limit_bytes=_VMEM_CAP),
    )(hc, crit_w, crit_b, lab_c)

    # --- BMES head: row-tiled grid, loss accumulated in VMEM scratch -------
    tm = _pick_block_rows(M, 256)
    bpred, bloss = pl.pallas_call(
        functools.partial(_bmes_head_kernel, n_tags=n_tags,
                          ignore_index=ignore_index),
        out_shape=(jax.ShapeDtypeStruct((M, LANE), jnp.float32),
                   jax.ShapeDtypeStruct((1, 1), jnp.float32)),
        grid=(M // tm,),
        in_specs=[
            pl.BlockSpec((tm, H), lambda i: (i, 0)),
            _wspec((H, LANE), lambda i: (0, 0)),
            _wspec((1, LANE), lambda i: (0, 0)),
            pl.BlockSpec((tm, 1), lambda i: (i, 0)),
        ],
        out_specs=(pl.BlockSpec((tm, LANE), lambda i: (i, 0)),
                   pl.BlockSpec((1, 1), lambda i: (0, 0))),
        scratch_shapes=[pltpu.VMEM((1, 1), jnp.float32),
                        pltpu.VMEM((1, 1), jnp.float32)],
        compiler_params=pltpu.CompilerParams(
            dimension_semantics=("arbitrary",),       # scratch loss accumulation
            vmem_limit_bytes=_VMEM_CAP),
    )(hb, bmes_w, bmes_b, lab_b)

    crit_pred = cpred[:, :n_dsets]
    bmes_pred = bpred[:, :n_tags].reshape(B, S - 2, n_tags)
    return crit_pred, bmes_pred, closs[0, 0], bloss[0, 0]


# ----------------------------- synthetic BERT params ---------------------------
def init_params(key, *, vocab=128, max_pos=64, hidden=128, num_heads=4,
                intermediate=256, num_layers=2, n_tags=len(TAG_SET),
                n_dsets=N_DSETS):
    keys = jax.random.split(key, 64)
    kit = iter(keys)

    def w(shape, dtype=jnp.bfloat16, scale=0.02):
        return (scale * jax.random.normal(next(kit), shape)).astype(dtype)

    head_dim = hidden // num_heads
    q_scale = 1.0 / float(head_dim) ** 0.5

    layers = []
    for _ in range(num_layers):
        # Bake the 1/sqrt(dh) attention scale into the Q projection (weights and
        # bias) so the attention kernel never scales the (S,S) score matrix.
        wqkv = w((hidden, 3 * hidden), jnp.float32)
        wqkv = wqkv.at[:, :hidden].multiply(q_scale).astype(jnp.bfloat16)
        bqkv = jnp.zeros((3 * hidden,), jnp.float32)    # zero bias: scale is a no-op
        layers.append(dict(
            wqkv=wqkv,                                  # fused, pre-scaled q|k|v
            bqkv=bqkv,
            wo=w((hidden, hidden)), bo=jnp.zeros((hidden,), jnp.float32),
            ln1_g=jnp.ones((hidden,), jnp.float32),
            ln1_b=jnp.zeros((hidden,), jnp.float32),
            w1=w((hidden, intermediate)),
            b1=jnp.zeros((intermediate,), jnp.float32),
            w2=w((intermediate, hidden)),
            b2=jnp.zeros((hidden,), jnp.float32),
            ln2_g=jnp.ones((hidden,), jnp.float32),
            ln2_b=jnp.zeros((hidden,), jnp.float32),
        ))

    encoder = dict(
        word_emb=w((vocab, hidden), jnp.float32),
        pos_emb=w((max_pos, hidden), jnp.float32),
        type_emb=w((2, hidden), jnp.float32),
        emb_ln_g=jnp.ones((hidden,), jnp.float32),
        emb_ln_b=jnp.zeros((hidden,), jnp.float32),
        layers=layers,
    )

    # lane-dense (zero-padded to 128 columns) classification head weights
    def pad_head(n_cls):
        w_raw = w((hidden, n_cls), jnp.bfloat16)
        wp = jnp.zeros((hidden, LANE), jnp.bfloat16).at[:, :n_cls].set(w_raw)
        bp = jnp.zeros((1, LANE), jnp.float32)
        return wp, bp

    crit_w, crit_b = pad_head(n_dsets)
    bmes_w, bmes_b = pad_head(n_tags)

    return dict(
        encoder=encoder, num_heads=num_heads,
        n_dsets=n_dsets, n_tags=n_tags,
        crit_w=crit_w, crit_b=crit_b,
        bmes_w=bmes_w, bmes_b=bmes_b,
    )


# ----------------------------- forward pass -------------------------------------
def encoder_forward(enc, num_heads, input_ids, token_type_ids, attention_mask):
    B, S = input_ids.shape
    H = enc["word_emb"].shape[1]

    pos = jnp.arange(S)
    x = (enc["word_emb"][input_ids]
         + enc["pos_emb"][pos][None, :, :]
         + enc["type_emb"][token_type_ids])                          # (B, S, H)
    x = layer_norm(x.reshape(B * S, H), enc["emb_ln_g"], enc["emb_ln_b"])
    x = x.reshape(B, S, H)

    mask_add = ((1.0 - attention_mask.astype(jnp.float32)) * -1e9).reshape(B, 1, S)

    for lyr in enc["layers"]:
        x = attention_block(x, mask_add, lyr["wqkv"], lyr["bqkv"], lyr["wo"],
                            lyr["bo"], lyr["ln1_g"], lyr["ln1_b"], num_heads)
        x = ffn_block(x.reshape(B * S, H), lyr["w1"], lyr["b1"], lyr["w2"],
                      lyr["b2"], lyr["ln2_g"], lyr["ln2_b"]).reshape(B, S, H)

    return x                                                          # last_hidden_state


def with_criterion_forward(params, attention_mask, input_ids, token_type_ids,
                           answer=None):
    hidden = encoder_forward(params["encoder"], params["num_heads"],
                             input_ids, token_type_ids, attention_mask)
    B, S, _ = hidden.shape

    # Dropout in both heads is identity in eval mode.
    if answer is None:
        dummy = jnp.zeros((B, 1 + (S - 2)), jnp.int32)
        crit_pred, bmes_pred, _, _ = heads_and_losses(
            hidden, params["crit_w"], params["crit_b"],
            params["bmes_w"], params["bmes_b"], dummy,
            params["n_dsets"], params["n_tags"], TAG_SET["pad"])
        return crit_pred, None, bmes_pred, None

    crit_pred, bmes_pred, crit_loss, bmes_loss = heads_and_losses(
        hidden, params["crit_w"], params["crit_b"],
        params["bmes_w"], params["bmes_b"], answer,
        params["n_dsets"], params["n_tags"], TAG_SET["pad"])
    return crit_pred, crit_loss, bmes_pred, bmes_loss


# ----------------------------- main ----------------------------------------------
if __name__ == "__main__":
    B, S = 2, 16          # sequence: [CLS], criterion token, 14 BMES tokens
    VOCAB = 128
    HIDDEN = 128          # lane-aligned small config (dh = 32)
    N_HEADS = 4
    INTER = 256
    N_TAGS = len(TAG_SET)

    key = jax.random.PRNGKey(0)
    k_params, k_ids, k_ans_c, k_ans_t = jax.random.split(key, 4)

    params = init_params(k_params, vocab=VOCAB, max_pos=64, hidden=HIDDEN,
                         num_heads=N_HEADS, intermediate=INTER, num_layers=2)

    input_ids = jax.random.randint(k_ids, (B, S), 0, VOCAB, dtype=jnp.int32)
    token_type_ids = jnp.zeros((B, S), dtype=jnp.int32)
    attention_mask = jnp.ones((B, S), dtype=jnp.int32)
    attention_mask = attention_mask.at[1, -2:].set(0)   # pad tail of sample 1

    # answer[:, 0] = criterion label, answer[:, 1:] = BMES tags for tokens 2:
    crit_label = jax.random.randint(k_ans_c, (B, 1), 0, N_DSETS, dtype=jnp.int32)
    bmes_label = jax.random.randint(k_ans_t, (B, S - 2), 0, 4, dtype=jnp.int32)
    bmes_label = bmes_label.at[1, -2:].set(TAG_SET["pad"])   # padded positions ignored
    answer = jnp.concatenate([crit_label, bmes_label], axis=1)  # (B, 1 + (S-2))

    out = with_criterion_forward(params, attention_mask, input_ids,
                                 token_type_ids, answer)
    out = jax.block_until_ready(out)

    criterion_pred, criterion_loss, bmes_pred, bmes_loss = out
    assert criterion_pred.shape == (B, N_DSETS)
    assert bmes_pred.shape == (B, S - 2, N_TAGS)
    assert criterion_loss.shape == () and bmes_loss.shape == ()
    assert bool(jnp.isfinite(criterion_loss)) and bool(jnp.isfinite(bmes_loss))

    print("KERNEL_OK")
</pallas_src>

<mosaic_0001>
module attributes {stable_mosaic.version = 11 : i64} {
  func.func @_copy(%arg0: i32, %arg1: memref<8x128xf32, #tpu.memory_space<vmem>>, %arg2: memref<8x128xf32, #tpu.memory_space<vmem>>) attributes {dimension_semantics = [#tpu.dimension_semantics<arbitrary>], iteration_bounds = array<i64: 1>, scalar_prefetch = 0 : i64, scratch_operands = 0 : i64, tpu.core_type = #tpu.core_type<tc>, window_params = [{pipeline_mode = #tpu.pipeline_mode<synchronous>, transform_indices = @transform_0, window_bounds = array<i64: 8, 128>}, {pipeline_mode = #tpu.pipeline_mode<synchronous>, transform_indices = @transform_1, window_bounds = array<i64: 8, 128>}]} {
    %c0 = arith.constant 0 : index
    %c0_0 = arith.constant 0 : index
    %0 = vector.load %arg1[%c0, %c0_0] : memref<8x128xf32, #tpu.memory_space<vmem>>, vector<8x128xf32>
    %c0_1 = arith.constant 0 : index
    %c0_2 = arith.constant 0 : index
    %1 = vector.load %arg2[%c0_1, %c0_2] : memref<8x128xf32, #tpu.memory_space<vmem>>, vector<8x128xf32>
    tpu.vector_store %arg2[%c0_1, %c0_2], %0 {strides = array<i32>} : memref<8x128xf32, #tpu.memory_space<vmem>>, vector<8x128xf32>,
    return
  }
  func.func @transform_0(%arg0: i32) -> (i32, i32) {
    %c0_i32 = arith.constant 0 : i32
    %c0_i32_0 = arith.constant 0 : i32
    %c0_i32_1 = arith.constant 0 : i32
    return %c0_i32, %c0_i32_0 : i32, i32
  }
  func.func @transform_1(%arg0: i32) -> (i32, i32) {
    %c0_i32 = arith.constant 0 : i32
    %c0_i32_0 = arith.constant 0 : i32
    %c0_i32_1 = arith.constant 0 : i32
    return %c0_i32, %c0_i32_0 : i32, i32
  }
}

module attributes {stable_mosaic.version = 11 : i64} {
  func.func @_layernorm_kernel(%arg0: i32, %arg1: memref<32x128xf32, #tpu.memory_space<vmem>>, %arg2: memref<1x128xf32, #tpu.memory_space<vmem>>, %arg3: memref<1x128xf32, #tpu.memory_space<vmem>>, %arg4: memref<32x128xf32, #tpu.memory_space<vmem>>) attributes {dimension_semantics = [#tpu.dimension_semantics<parallel>], iteration_bounds = array<i64: 1>, scalar_prefetch = 0 : i64, scratch_operands = 0 : i64, tpu.core_type = #tpu.core_type<tc>, window_params = [{transform_indices = @transform_0, window_bounds = array<i64: 32, 128>}, {pipeline_mode = #tpu.pipeline_mode<synchronous>, transform_indices = @transform_1, window_bounds = array<i64: 1, 128>}, {pipeline_mode = #tpu.pipeline_mode<synchronous>, transform_indices = @transform_2, window_bounds = array<i64: 1, 128>}, {transform_indices = @transform_3, window_bounds = array<i64: 32, 128>}]} {
    %c0 = arith.constant 0 : index
    %c0_0 = arith.constant 0 : index
    %0 = vector.load %arg1[%c0, %c0_0] : memref<32x128xf32, #tpu.memory_space<vmem>>, vector<32x128xf32>
    %cst = arith.constant dense<0.000000e+00> : vector<32xf32>
    %1 = vector.multi_reduction <add>, %0, %cst [1] : vector<32x128xf32> to vector<32xf32>
    %2 = vector.shape_cast %1 : vector<32xf32> to vector<32x1xf32>
    %cst_1 = arith.constant 1.280000e+02 : f32
    %3 = vector.broadcast %cst_1 : f32 to vector<32x1xf32>
    %4 = arith.divf %2, %3 : vector<32x1xf32>
    %5 = vector.broadcast %4 : vector<32x1xf32> to vector<32x128xf32>
    %6 = arith.subf %0, %5 : vector<32x128xf32>
    %7 = arith.mulf %6, %6 : vector<32x128xf32>
    %cst_2 = arith.constant dense<0.000000e+00> : vector<32xf32>
    %8 = vector.multi_reduction <add>, %7, %cst_2 [1] : vector<32x128xf32> to vector<32xf32>
    %9 = vector.shape_cast %8 : vector<32xf32> to vector<32x1xf32>
    %cst_3 = arith.constant 1.280000e+02 : f32
    %10 = vector.broadcast %cst_3 : f32 to vector<32x1xf32>
    %11 = arith.divf %9, %10 : vector<32x1xf32>
    %12 = vector.broadcast %4 : vector<32x1xf32> to vector<32x128xf32>
    %13 = arith.subf %0, %12 : vector<32x128xf32>
    %cst_4 = arith.constant 9.99999996E-13 : f32
    %14 = vector.broadcast %cst_4 : f32 to vector<32x1xf32>
    %15 = arith.addf %11, %14 : vector<32x1xf32>
    %16 = math.rsqrt %15 : vector<32x1xf32>
    %17 = vector.broadcast %16 : vector<32x1xf32> to vector<32x128xf32>
    %18 = arith.mulf %13, %17 : vector<32x128xf32>
    %c0_5 = arith.constant 0 : index
    %c0_6 = arith.constant 0 : index
    %19 = vector.load %arg2[%c0_5, %c0_6] : memref<1x128xf32, #tpu.memory_space<vmem>>, vector<1x128xf32>
    %20 = vector.broadcast %19 : vector<1x128xf32> to vector<32x128xf32>
    %21 = arith.mulf %18, %20 : vector<32x128xf32>
    %c0_7 = arith.constant 0 : index
    %c0_8 = arith.constant 0 : index
    %22 = vector.load %arg3[%c0_7, %c0_8] : memref<1x128xf32, #tpu.memory_space<vmem>>, vector<1x128xf32>
    %23 = vector.broadcast %22 : vector<1x128xf32> to vector<32x128xf32>
    %24 = arith.addf %21, %23 : vector<32x128xf32>
    %c0_9 = arith.constant 0 : index
    %c0_10 = arith.constant 0 : index
    %25 = vector.load %arg4[%c0_9, %c0_10] : memref<32x128xf32, #tpu.memory_space<vmem>>, vector<32x128xf32>
    tpu.vector_store %arg4[%c0_9, %c0_10], %24 {strides = array<i32>} : memref<32x128xf32, #tpu.memory_space<vmem>>, vector<32x128xf32>,
    return
  }
  func.func @transform_0(%arg0: i32) -> (i32, i32) {
    %c0_i32 = arith.constant 0 : i32
    %c0_i32_0 = arith.constant 0 : i32
    return %arg0, %c0_i32 : i32, i32
  }
  func.func @transform_1(%arg0: i32) -> (i32, i32) {
    %c0_i32 = arith.constant 0 : i32
    %c0_i32_0 = arith.constant 0 : i32
    %c0_i32_1 = arith.constant 0 : i32
    return %c0_i32, %c0_i32_0 : i32, i32
  }
  func.func @transform_2(%arg0: i32) -> (i32, i32) {
    %c0_i32 = arith.constant 0 : i32
    %c0_i32_0 = arith.constant 0 : i32
    %c0_i32_1 = arith.constant 0 : i32
    return %c0_i32, %c0_i32_0 : i32, i32
  }
  func.func @transform_3(%arg0: i32) -> (i32, i32) {
    %c0_i32 = arith.constant 0 : i32
    %c0_i32_0 = arith.constant 0 : i32
    return %arg0, %c0_i32 : i32, i32
  }
}

</mosaic_0001>

<llo_original>
// kernel: tpu_custom_call.1
$region0: #{tpu_custom_call.1}
  #allocation0 [shape = 'u32[]', space=smem, size = 0x4, offset = 0x4, fixed_abs, tag = 'smem constant byte address 0x4 - core index']
  #allocation1 [shape = 'u32[144,128]{1,0:T(1,128)}', space=vmem, size = 0x12000, scoped, tag = 'internal scratch']
  %s0 = inlined_call_operand.hbm [shape: f32[8,128], index: 0, kind: input, shape index: {}]
  %s1 = inlined_call_operand.hbm [shape: f32[8,128], index: 1, kind: output, shape index: {}]
  %s2 = sld [smem:[#allocation0]]
  $region18: #{tpu_custom_call.1} parent=0
    _
  %s4 = ssub.s32 1, %s2
  %s5 = scalar_select 0, %s4, %s2
  $region1: #{tpu_custom_call.1} parent=0
    #allocation2 [shape = 'u8[4096]{0}', space=vmem, size = 0x1000, scoped, tag = 'input window, operand 0, single buffered']
    #allocation3 [shape = 's32[1]{0}', space=sflag, size = 0x4, scoped, tag = 'scoped memory for tpu_custom_call.1']
    #allocation4 [shape = 's32[1]{0}', space=sflag, size = 0x4, scoped, tag = 'scoped memory for tpu_custom_call.1']
    #allocation5 [shape = 'u8[4096]{0}', space=vmem, size = 0x1000, scoped, tag = 'output window, operand 0, single buffered']
    %6 = vsyncpa [#allocation3], 0
    %7 = vsyncpa [#allocation4], 0
    // Predicated region
    $region2: #{tpu_custom_call.1} parent=1 // pred_check
      _
    $region3: #{tpu_custom_call.1} parent=1 // pred_check_branch
      %9 = sbr.rel (0) target = $region5
    $region4: #{tpu_custom_call.1} parent=1 // pred_region
      %s11 = ssub.s32 128, 128
      %12 = vsyncadd [#allocation3], %s11
      %s14 = sshll.u32 [#allocation2], 4
      %s15 = int_to_ptr.vmem [resolvable:$true] %s14
      %17 = dma.hbm_to_vmem [thread:$0]  %s0, 128, %s15, [#allocation3]
    $region5: #{tpu_custom_call.1} parent=1 // pred_fallthru
      _
    // Predicated region
    $region6: #{tpu_custom_call.1} parent=1 // pred_check
      _
    $region7: #{tpu_custom_call.1} parent=1 // pred_check_branch
      %19 = sbr.rel (0) target = $region9
    $region8: #{tpu_custom_call.1} parent=1 // pred_region
      %20 = dma.done [#allocation3], 128
    $region9: #{tpu_custom_call.1} parent=1 // pred_fallthru
      _
    %v21 = vld [vmem:[#allocation2] sm:$0xff]
    %22 = vst [vmem:[#allocation5] sm:$0xff] %v21
    // Predicated region
    $region10: #{tpu_custom_call.1} parent=1 // pred_check
      _
    $region11: #{tpu_custom_call.1} parent=1 // pred_check_branch
      %24 = sbr.rel (0) target = $region13
    $region12: #{tpu_custom_call.1} parent=1 // pred_region
      %s26 = ssub.s32 128, 128
      %27 = vsyncadd [#allocation4], %s26
      %s29 = sshll.u32 [#allocation5], 4
      %s30 = int_to_ptr.vmem [resolvable:$true] %s29
      %32 = dma.vmem_to_hbm [thread:$0]  %s30, 128, %s1, [#allocation4]
    $region13: #{tpu_custom_call.1} parent=1 // pred_fallthru
      _
    // Predicated region
    $region14: #{tpu_custom_call.1} parent=1 // pred_check
      _
    $region15: #{tpu_custom_call.1} parent=1 // pred_check_branch
      %34 = sbr.rel (0) target = $region17
    $region16: #{tpu_custom_call.1} parent=1 // pred_region
      %35 = dma.done [#allocation4], 128
    $region17: #{tpu_custom_call.1} parent=1 // pred_fallthru
      _
    %36 = vsyncpa [#allocation3], 1
    %37 = vsyncpa [#allocation4], 1

// kernel: tpu_custom_call.1
$region0: #{tpu_custom_call.1}
  #allocation0 [shape = 'u32[]', space=smem, size = 0x4, offset = 0x4, fixed_abs, tag = 'smem constant byte address 0x4 - core index']
  #allocation1 [shape = 'u32[144,128]{1,0:T(1,128)}', space=vmem, size = 0x12000, scoped, tag = 'internal scratch']
  %s0 = inlined_call_operand.hbm [shape: f32[32,128], index: 0, kind: input, shape index: {}]
  %s1 = inlined_call_operand.vmem [shape: f32[1,128], index: 1, kind: input, shape index: {}]
  %s2 = inlined_call_operand.vmem [shape: f32[1,128], index: 2, kind: input, shape index: {}]
  %s3 = inlined_call_operand.hbm [shape: f32[32,128], index: 3, kind: output, shape index: {}]
  %s4 = sld [smem:[#allocation0]]
  $region26: #{tpu_custom_call.1} parent=0
    _
  %s6 = ssub.s32 1, %s4
  %s7 = scalar_select 0, %s6, %s4
  $region1: #{tpu_custom_call.1} parent=0
    #allocation2 [shape = 'u8[16384]{0}', space=vmem, size = 0x4000, scoped, tag = 'input window, operand 0, single buffered']
    #allocation3 [shape = 's32[1]{0}', space=sflag, size = 0x4, scoped, tag = 'scoped memory for tpu_custom_call.1']
    #allocation4 [shape = 's32[1]{0}', space=sflag, size = 0x4, scoped, tag = 'scoped memory for tpu_custom_call.1']
    #allocation5 [shape = 'u8[16384]{0}', space=vmem, size = 0x4000, scoped, tag = 'output window, operand 0, single buffered']
    %8 = vsyncpa [#allocation3], 0
    %9 = vsyncpa [#allocation4], 0
    // Predicated region
    $region2: #{tpu_custom_call.1} parent=1 // pred_check
      _
    $region3: #{tpu_custom_call.1} parent=1 // pred_check_branch
      %11 = sbr.rel (0) target = $region5
    $region4: #{tpu_custom_call.1} parent=1 // pred_region
      %s13 = ssub.s32 512, 512
      %14 = vsyncadd [#allocation3], %s13
      %s15 = sshll.u32 [#allocation2], 4
      %s16 = int_to_ptr.vmem [resolvable:$true] %s15
      %21 = dma.hbm_to_vmem [thread:$0]  %s0, 512, %s16, [#allocation3], 128, 128, 8
    $region5: #{tpu_custom_call.1} parent=1 // pred_fallthru
      _
    // Predicated region
    $region6: #{tpu_custom_call.1} parent=1 // pred_check
      _
    $region7: #{tpu_custom_call.1} parent=1 // pred_check_branch
      %23 = sbr.rel (0) target = $region9
    $region8: #{tpu_custom_call.1} parent=1 // pred_region
      _
    $region9: #{tpu_custom_call.1} parent=1 // pred_fallthru
      _
    // Predicated region
    $region10: #{tpu_custom_call.1} parent=1 // pred_check
      _
    $region11: #{tpu_custom_call.1} parent=1 // pred_check_branch
      %25 = sbr.rel (0) target = $region13
    $region12: #{tpu_custom_call.1} parent=1 // pred_region
      _
    $region13: #{tpu_custom_call.1} parent=1 // pred_fallthru
      _
    // Predicated region
    $region14: #{tpu_custom_call.1} parent=1 // pred_check
      _
    $region15: #{tpu_custom_call.1} parent=1 // pred_check_branch
      %27 = sbr.rel (0) target = $region17
    $region16: #{tpu_custom_call.1} parent=1 // pred_region
      %28 = dma.done [#allocation3], 512
    $region17: #{tpu_custom_call.1} parent=1 // pred_fallthru
      _
    %v29 = vld [vmem:[#allocation2] sm:$0xff]
    %v30 = vld [vmem:[#allocation2 + $0x8] sm:$0xff]
    %v31 = vld [vmem:[#allocation2 + $0x10] sm:$0xff]
    %v32 = vld [vmem:[#allocation2 + $0x18] sm:$0xff]
    %33 = vadd.xlane.f32.xlu0 %v29
    %v34 = vpop.xlane.xlu0 %33
    %35 = vadd.xlane.f32.xlu0 %v30
    %v36 = vpop.xlane.xlu0 %35
    %37 = vadd.xlane.f32.xlu0 %v31
    %v38 = vpop.xlane.xlu0 %37
    %39 = vadd.xlane.f32.xlu0 %v32
    %v40 = vpop.xlane.xlu0 %39
    %v41 = vrcp.pop 128.0
    %v42 = vmul.f32 %v34, %v41
    %v43 = vmul.f32 %v36, %v41
    %v44 = vmul.f32 %v38, %v41
    %v45 = vmul.f32 %v40, %v41
    %v46 = vsub.f32 %v29, %v42
    %v47 = vsub.f32 %v30, %v43
    %v48 = vsub.f32 %v31, %v44
    %v49 = vsub.f32 %v32, %v45
    %v50 = vmul.f32 %v46, %v46
    %v51 = vmul.f32 %v47, %v47
    %v52 = vmul.f32 %v48, %v48
    %v53 = vmul.f32 %v49, %v49
    %54 = vadd.xlane.f32.xlu0 %v50
    %v55 = vpop.xlane.xlu0 %54
    %56 = vadd.xlane.f32.xlu0 %v51
    %v57 = vpop.xlane.xlu0 %56
    %58 = vadd.xlane.f32.xlu0 %v52
    %v59 = vpop.xlane.xlu0 %58
    %60 = vadd.xlane.f32.xlu0 %v53
    %v61 = vpop.xlane.xlu0 %60
    %v62 = vmul.f32 %v55, %v41
    %v63 = vmul.f32 %v57, %v41
    %v64 = vmul.f32 %v59, %v41
    %v65 = vmul.f32 %v61, %v41
    %v66 = vadd.f32 %v62, 1e-12
    %v67 = vadd.f32 %v63, 1e-12
    %v68 = vadd.f32 %v64, 1e-12
    %v69 = vadd.f32 %v65, 1e-12
    %v70 = vrsqrt.pop %v66
    %v71 = vrsqrt.pop %v67
    %v72 = vrsqrt.pop %v68
    %v73 = vrsqrt.pop %v69
    %v74 = vmul.f32 %v46, %v70
    %v75 = vmul.f32 %v47, %v71
    %v76 = vmul.f32 %v48, %v72
    %v77 = vmul.f32 %v49, %v73
    %v78 = vld [vmem:[%s1] sm:$0x1]
    %v80 = vlaneseq
    %v81 = vshrl.u32 %v80, 7
    %v82 = vsub.s32 0, %v81
    %v83 = vrot.slane %v78, %v82
    %v85 = vmul.f32 %v74, %v83
    %v86 = vmul.f32 %v75, %v83
    %v87 = vmul.f32 %v76, %v83
    %v88 = vmul.f32 %v77, %v83
    %v89 = vld [vmem:[%s2] sm:$0x1]
    %v91 = vlaneseq
    %v92 = vshrl.u32 %v91, 7
    %v93 = vsub.s32 0, %v92
    %v94 = vrot.slane %v89, %v93
    %v96 = vadd.f32 %v85, %v94
    %v97 = vadd.f32 %v86, %v94
    %v98 = vadd.f32 %v87, %v94
    %v99 = vadd.f32 %v88, %v94
    %100 = vst [vmem:[#allocation5] sm:$0xff] %v96
    %101 = vst [vmem:[#allocation5 + $0x8] sm:$0xff] %v97
    %102 = vst [vmem:[#allocation5 + $0x10] sm:$0xff] %v98
    %103 = vst [vmem:[#allocation5 + $0x18] sm:$0xff] %v99
    // Predicated region
    $region18: #{tpu_custom_call.1} parent=1 // pred_check
      _
    $region19: #{tpu_custom_call.1} parent=1 // pred_check_branch
      %105 = sbr.rel (0) target = $region21
    $region20: #{tpu_custom_call.1} parent=1 // pred_region
      %s107 = ssub.s32 512, 512
      %108 = vsyncadd [#allocation4], %s107
      %s109 = sshll.u32 [#allocation5], 4
      %s110 = int_to_ptr.vmem [resolvable:$true] %s109
      %115 = dma.vmem_to_hbm [thread:$0]  %s110, 512, %s3, [#allocation4], 128, 128, 8
    $region21: #{tpu_custom_call.1} parent=1 // pred_fallthru
      _
    // Predicated region
    $region22: #{tpu_custom_call.1} parent=1 // pred_check
      _
    $region23: #{tpu_custom_call.1} parent=1 // pred_check_branch
      %117 = sbr.rel (0) target = $region25
    $region24: #{tpu_custom_call.1} parent=1 // pred_region
      %118 = dma.done [#allocation4], 512
    $region25: #{tpu_custom_call.1} parent=1 // pred_fallthru
      _
    %119 = vsyncpa [#allocation3], 1
    %120 = vsyncpa [#allocation4], 1

</llo_original>
